<compile_context>
chip_gen: v7x
topology: tpu7x:2x2x1
jax: 0.10.0
libtpu: 0.0.40
codegen_flags: <defaults>
</compile_context>

<pallas_src>
import functools

import jax
import jax.numpy as jnp
from jax.experimental import pallas as pl
from jax.experimental.pallas import tpu as pltpu


def _round_up(x, m):
    return (x + m - 1) // m * m


def _ntxent_kernel(zr_ref, zc_ref, o_ref, m_sc, l_sc, p_sc, *,
                   batch_size, n_valid, inv_temp, tile_m, tile_n, use_bf16):
    ri = pl.program_id(0)          # row-tile index  ("parallel")
    ci = pl.program_id(1)          # column-tile index (reduction, "arbitrary")

    # ---- init running logsumexp / positive accumulators for this row tile ----
    @pl.when(ci == 0)
    def _():
        m_sc[...] = jnp.full_like(m_sc, -jnp.inf)
        l_sc[...] = jnp.zeros_like(l_sc)
        p_sc[...] = jnp.zeros_like(p_sc)

    zr = zr_ref[...].astype(jnp.float32)          # (tile_m, Dp)
    zc = zc_ref[...].astype(jnp.float32)          # (tile_n, Dp)

    # Row-wise L2 normalization; 1/temperature folded into the row operand so
    # the matmul output is already s = cos_sim / T.  (Per-row eps clamp instead
    # of torch's pairwise max(||x||*||y||, eps); identical for non-degenerate
    # inputs.)  Zero-padded rows stay exactly zero.
    zr_n = zr * (jax.lax.rsqrt(
        jnp.maximum(jnp.sum(zr * zr, axis=-1, keepdims=True), 1e-16)) * inv_temp)
    zc_n = zc * jax.lax.rsqrt(
        jnp.maximum(jnp.sum(zc * zc, axis=-1, keepdims=True), 1e-16))

    if use_bf16:   # v6e/v7x MXU fast path; accumulation stays f32.
        zr_n = zr_n.astype(jnp.bfloat16)
        zc_n = zc_n.astype(jnp.bfloat16)

    # Contract the last dim of both operands -> MXU consumes native layout.
    s = jax.lax.dot_general(zr_n, zc_n, (((1,), (1,)), ((), ())),
                            preferred_element_type=jnp.float32)  # (tile_m, tile_n)

    row_g = ri * tile_m + jax.lax.broadcasted_iota(jnp.int32, (tile_m, tile_n), 0)
    col_g = ci * tile_n + jax.lax.broadcasted_iota(jnp.int32, (tile_m, tile_n), 1)

    # Exclude self-similarity and zero-padded columns from the logsumexp.
    excluded = (row_g == col_g) | (col_g >= n_valid)
    s_m = jnp.where(excluded, jnp.float32(-1e30), s)

    # Online (flash-style) logsumexp update.
    m_prev = m_sc[...]
    m_new = jnp.maximum(m_prev, jnp.max(s_m, axis=-1, keepdims=True))
    alpha = jnp.exp(m_prev - m_new)
    l_sc[...] = alpha * l_sc[...] + jnp.sum(jnp.exp(s_m - m_new), axis=-1,
                                            keepdims=True)
    m_sc[...] = m_new

    # Positive pair: partner(i) = i + B (first half) or i - B (second half).
    # A spurious match on a zero-padded column contributes exactly 0.
    pos_mask = (col_g == row_g + batch_size) | (col_g == row_g - batch_size)
    p_sc[...] += jnp.sum(jnp.where(pos_mask, s, 0.0), axis=-1, keepdims=True)

    # ---- finalize: emit per-row (lse - pos), zeroing padded rows -------------
    @pl.when(ci == pl.num_programs(1) - 1)
    def _():
        terms = m_sc[...] + jnp.log(l_sc[...]) - p_sc[...]           # (tile_m, 1)
        rows = ri * tile_m + jax.lax.broadcasted_iota(jnp.int32, (tile_m, 1), 0)
        o_ref[...] = jnp.where(rows < n_valid, terms, 0.0)


def ntxent_loss(z_i, z_j, temperature, *, block_size=256, use_bf16_matmul=False):
    """NT-Xent loss.  z_i, z_j: (batch, hidden).  Returns scalar float32.

    block_size: row/column tile size (multiple of 8). 256 matches the 2x256^2
    MXU on v6e/v7x; use 128 on v5e (4x128^2 MXU).
    """
    assert z_i.shape == z_j.shape
    batch, d = z_i.shape
    n = 2 * batch

    t = _round_up(min(block_size, _round_up(n, 8)), 8)   # tile size (rows & cols)
    n_pad = _round_up(n, t)
    d_pad = _round_up(d, 128)                            # full-lane contraction

    # One fused pad + concat copy (the padding subsumes the torch.cat).
    z = jnp.zeros((n_pad, d_pad), jnp.float32)
    z = z.at[:batch, :d].set(z_i.astype(jnp.float32))
    z = z.at[batch:n, :d].set(z_j.astype(jnp.float32))

    grid = (n_pad // t, n_pad // t)

    kernel = functools.partial(
        _ntxent_kernel,
        batch_size=batch, n_valid=n, inv_temp=1.0 / float(temperature),
        tile_m=t, tile_n=t, use_bf16=use_bf16_matmul)

    per_row = pl.pallas_call(
        kernel,
        out_shape=jax.ShapeDtypeStruct((n_pad, 1), jnp.float32),
        grid_spec=pltpu.PrefetchScalarGridSpec(
            num_scalar_prefetch=0,
            grid=grid,
            in_specs=[
                pl.BlockSpec((t, d_pad), lambda ri, ci: (ri, 0)),   # query rows
                pl.BlockSpec((t, d_pad), lambda ri, ci: (ci, 0)),   # key rows
            ],
            out_specs=pl.BlockSpec((t, 1), lambda ri, ci: (ri, 0)),
            scratch_shapes=[pltpu.VMEM((t, 1), jnp.float32),    # running max
                            pltpu.VMEM((t, 1), jnp.float32),    # running sum
                            pltpu.VMEM((t, 1), jnp.float32)],   # positive logit
        ),
        compiler_params=pltpu.CompilerParams(
            dimension_semantics=("parallel", "arbitrary")),
    )(z, z)

    return jnp.sum(per_row) / jnp.float32(n)


def _reference_ntxent(z_i, z_j, temperature):
    """Pure-JAX reference mirroring the PyTorch module, for sanity checking."""
    batch = z_i.shape[0]
    n = 2 * batch
    r = jnp.concatenate([z_i, z_j], axis=0).astype(jnp.float32)
    norms = jnp.linalg.norm(r, axis=-1, keepdims=True)
    sim = (r @ r.T) / jnp.maximum(norms * norms.T, 1e-8) / temperature
    idx = jnp.arange(n)
    partner = (idx + batch) % n
    pos = sim[idx, partner]
    sim_masked = jnp.where(jnp.eye(n, dtype=bool), -jnp.inf, sim)
    lse = jax.scipy.special.logsumexp(sim_masked, axis=-1)
    return jnp.sum(lse - pos) / n


if __name__ == "__main__":
    temperature = 0.5
    key = jax.random.PRNGKey(0)
    k1, k2, k3, k4 = jax.random.split(key, 4)

    # Small case consistent with the module (batch=4, hidden=32): single tile.
    z_i = jax.random.normal(k1, (4, 32), dtype=jnp.float32)
    z_j = jax.random.normal(k2, (4, 32), dtype=jnp.float32)
    loss = jax.block_until_ready(ntxent_loss(z_i, z_j, temperature))
    ref = _reference_ntxent(z_i, z_j, temperature)
    assert jnp.allclose(loss, ref, rtol=1e-5, atol=1e-5), (loss, ref)

    # Non-aligned case exercising the multi-tile grid + padding/masking path.
    z_i2 = jax.random.normal(k3, (13, 40), dtype=jnp.float32)
    z_j2 = jax.random.normal(k4, (13, 40), dtype=jnp.float32)
    loss2 = jax.block_until_ready(
        ntxent_loss(z_i2, z_j2, temperature, block_size=16))
    ref2 = _reference_ntxent(z_i2, z_j2, temperature)
    assert jnp.allclose(loss2, ref2, rtol=1e-5, atol=1e-5), (loss2, ref2)

    # bf16-into-MXU fast path (v6e/v7x); looser tolerance for bf16 logits.
    loss3 = jax.block_until_ready(
        ntxent_loss(z_i2, z_j2, temperature, block_size=16, use_bf16_matmul=True))
    assert jnp.allclose(loss3, ref2, rtol=5e-2, atol=5e-2), (loss3, ref2)

    print("KERNEL_OK")
</pallas_src>

<mosaic_0001>
module attributes {stable_mosaic.version = 11 : i64} {
  func.func @_ntxent_kernel(%arg0: i32, %arg1: i32, %arg2: memref<8x128xf32, #tpu.memory_space<vmem>>, %arg3: memref<8x128xf32, #tpu.memory_space<vmem>>, %arg4: memref<8x1xf32, #tpu.memory_space<vmem>>, %arg5: memref<8x1xf32, #tpu.memory_space<vmem>>, %arg6: memref<8x1xf32, #tpu.memory_space<vmem>>, %arg7: memref<8x1xf32, #tpu.memory_space<vmem>>) attributes {dimension_semantics = [#tpu.dimension_semantics<parallel>, #tpu.dimension_semantics<arbitrary>], iteration_bounds = array<i64: 1, 1>, scalar_prefetch = 0 : i64, scratch_operands = 3 : i64, tpu.core_type = #tpu.core_type<tc>, window_params = [{transform_indices = @transform_0, window_bounds = array<i64: 8, 128>}, {transform_indices = @transform_1, window_bounds = array<i64: 8, 128>}, {transform_indices = @transform_2, window_bounds = array<i64: 8, 1>}]} {
    %c0_i32 = arith.constant 0 : i32
    %0 = arith.cmpi eq, %arg1, %c0_i32 : i32
    %1 = arith.extui %0 : i1 to i32
    %c0_i32_0 = arith.constant 0 : i32
    %2 = arith.cmpi ne, %1, %c0_i32_0 : i32
    scf.if %2 {
      %cst_31 = arith.constant 0xFF800000 : f32
      %71 = vector.broadcast %cst_31 : f32 to vector<8x1xf32>
      %c0_32 = arith.constant 0 : index
      %c0_33 = arith.constant 0 : index
      %72 = vector.load %arg5[%c0_32, %c0_33] : memref<8x1xf32, #tpu.memory_space<vmem>>, vector<8x1xf32>
      tpu.vector_store %arg5[%c0_32, %c0_33], %71 {strides = array<i32>} : memref<8x1xf32, #tpu.memory_space<vmem>>, vector<8x1xf32>,
      %cst_34 = arith.constant 0.000000e+00 : f32
      %73 = vector.broadcast %cst_34 : f32 to vector<8x1xf32>
      %c0_35 = arith.constant 0 : index
      %c0_36 = arith.constant 0 : index
      %74 = vector.load %arg6[%c0_35, %c0_36] : memref<8x1xf32, #tpu.memory_space<vmem>>, vector<8x1xf32>
      tpu.vector_store %arg6[%c0_35, %c0_36], %73 {strides = array<i32>} : memref<8x1xf32, #tpu.memory_space<vmem>>, vector<8x1xf32>,
      %cst_37 = arith.constant 0.000000e+00 : f32
      %75 = vector.broadcast %cst_37 : f32 to vector<8x1xf32>
      %c0_38 = arith.constant 0 : index
      %c0_39 = arith.constant 0 : index
      %76 = vector.load %arg7[%c0_38, %c0_39] : memref<8x1xf32, #tpu.memory_space<vmem>>, vector<8x1xf32>
      tpu.vector_store %arg7[%c0_38, %c0_39], %75 {strides = array<i32>} : memref<8x1xf32, #tpu.memory_space<vmem>>, vector<8x1xf32>,
    } else {
    }
    %c0 = arith.constant 0 : index
    %c0_1 = arith.constant 0 : index
    %3 = vector.load %arg2[%c0, %c0_1] : memref<8x128xf32, #tpu.memory_space<vmem>>, vector<8x128xf32>
    %c0_2 = arith.constant 0 : index
    %c0_3 = arith.constant 0 : index
    %4 = vector.load %arg3[%c0_2, %c0_3] : memref<8x128xf32, #tpu.memory_space<vmem>>, vector<8x128xf32>
    %5 = arith.mulf %3, %3 : vector<8x128xf32>
    %cst = arith.constant dense<0.000000e+00> : vector<8xf32>
    %6 = vector.multi_reduction <add>, %5, %cst [1] : vector<8x128xf32> to vector<8xf32>
    %7 = vector.shape_cast %6 : vector<8xf32> to vector<8x1xf32>
    %cst_4 = arith.constant 1.000000e-16 : f32
    %8 = vector.broadcast %cst_4 : f32 to vector<8x1xf32>
    %9 = arith.maximumf %7, %8 : vector<8x1xf32>
    %10 = math.rsqrt %9 : vector<8x1xf32>
    %cst_5 = arith.constant 2.000000e+00 : f32
    %11 = vector.broadcast %cst_5 : f32 to vector<8x1xf32>
    %12 = arith.mulf %10, %11 : vector<8x1xf32>
    %13 = vector.broadcast %12 : vector<8x1xf32> to vector<8x128xf32>
    %14 = arith.mulf %3, %13 : vector<8x128xf32>
    %15 = arith.mulf %4, %4 : vector<8x128xf32>
    %cst_6 = arith.constant dense<0.000000e+00> : vector<8xf32>
    %16 = vector.multi_reduction <add>, %15, %cst_6 [1] : vector<8x128xf32> to vector<8xf32>
    %17 = vector.shape_cast %16 : vector<8xf32> to vector<8x1xf32>
    %cst_7 = arith.constant 1.000000e-16 : f32
    %18 = vector.broadcast %cst_7 : f32 to vector<8x1xf32>
    %19 = arith.maximumf %17, %18 : vector<8x1xf32>
    %20 = math.rsqrt %19 : vector<8x1xf32>
    %21 = vector.broadcast %20 : vector<8x1xf32> to vector<8x128xf32>
    %22 = arith.mulf %4, %21 : vector<8x128xf32>
    %cst_8 = arith.constant dense<0.000000e+00> : vector<8x8xf32>
    %23 = tpu.matmul %14, %22, %cst_8 {dimension_numbers = #tpu.dot_dimension_numbers<[1], [1], [0], [0], [0, 0, 1, 0], [], []>} : vector<8x128xf32>, vector<8x128xf32>, vector<8x8xf32> -> vector<8x8xf32>
    %c8_i32 = arith.constant 8 : i32
    %24 = arith.muli %arg0, %c8_i32 : i32
    %25 = tpu.iota {dimensions = array<i32: 0>} : vector<8x8xi32>
    %26 = vector.broadcast %24 : i32 to vector<8x8xi32>
    %27 = arith.addi %26, %25 : vector<8x8xi32>
    %c8_i32_9 = arith.constant 8 : i32
    %28 = arith.muli %arg1, %c8_i32_9 : i32
    %29 = tpu.iota {dimensions = array<i32: 1>} : vector<8x8xi32>
    %30 = vector.broadcast %28 : i32 to vector<8x8xi32>
    %31 = arith.addi %30, %29 : vector<8x8xi32>
    %32 = arith.cmpi eq, %27, %31 : vector<8x8xi32>
    %c8_i32_10 = arith.constant 8 : i32
    %33 = vector.broadcast %c8_i32_10 : i32 to vector<8x8xi32>
    %34 = arith.cmpi sge, %31, %33 : vector<8x8xi32>
    %35 = arith.ori %32, %34 : vector<8x8xi1>
    %cst_11 = arith.constant -1.000000e+30 : f32
    %36 = vector.broadcast %cst_11 : f32 to vector<8x8xf32>
    %37 = arith.select %35, %36, %23 : vector<8x8xi1>, vector<8x8xf32>
    %c0_12 = arith.constant 0 : index
    %c0_13 = arith.constant 0 : index
    %38 = vector.load %arg5[%c0_12, %c0_13] : memref<8x1xf32, #tpu.memory_space<vmem>>, vector<8x1xf32>
    %cst_14 = arith.constant dense<0xFF800000> : vector<8xf32>
    %39 = vector.multi_reduction <maximumf>, %37, %cst_14 [1] : vector<8x8xf32> to vector<8xf32>
    %40 = vector.shape_cast %39 : vector<8xf32> to vector<8x1xf32>
    %41 = arith.maximumf %38, %40 : vector<8x1xf32>
    %42 = arith.subf %38, %41 : vector<8x1xf32>
    %43 = math.exp %42 : vector<8x1xf32>
    %c0_15 = arith.constant 0 : index
    %c0_16 = arith.constant 0 : index
    %44 = vector.load %arg6[%c0_15, %c0_16] : memref<8x1xf32, #tpu.memory_space<vmem>>, vector<8x1xf32>
    %45 = arith.mulf %43, %44 : vector<8x1xf32>
    %46 = vector.broadcast %41 : vector<8x1xf32> to vector<8x8xf32>
    %47 = arith.subf %37, %46 : vector<8x8xf32>
    %48 = math.exp %47 : vector<8x8xf32>
    %cst_17 = arith.constant dense<0.000000e+00> : vector<8xf32>
    %49 = vector.multi_reduction <add>, %48, %cst_17 [1] : vector<8x8xf32> to vector<8xf32>
    %50 = vector.shape_cast %49 : vector<8xf32> to vector<8x1xf32>
    %51 = arith.addf %45, %50 : vector<8x1xf32>
    %c0_18 = arith.constant 0 : index
    %c0_19 = arith.constant 0 : index
    %52 = vector.load %arg6[%c0_18, %c0_19] : memref<8x1xf32, #tpu.memory_space<vmem>>, vector<8x1xf32>
    tpu.vector_store %arg6[%c0_18, %c0_19], %51 {strides = array<i32>} : memref<8x1xf32, #tpu.memory_space<vmem>>, vector<8x1xf32>,
    %c0_20 = arith.constant 0 : index
    %c0_21 = arith.constant 0 : index
    %53 = vector.load %arg5[%c0_20, %c0_21] : memref<8x1xf32, #tpu.memory_space<vmem>>, vector<8x1xf32>
    tpu.vector_store %arg5[%c0_20, %c0_21], %41 {strides = array<i32>} : memref<8x1xf32, #tpu.memory_space<vmem>>, vector<8x1xf32>,
    %c4_i32 = arith.constant 4 : i32
    %54 = vector.broadcast %c4_i32 : i32 to vector<8x8xi32>
    %55 = arith.addi %27, %54 : vector<8x8xi32>
    %56 = arith.cmpi eq, %31, %55 : vector<8x8xi32>
    %c4_i32_22 = arith.constant 4 : i32
    %57 = vector.broadcast %c4_i32_22 : i32 to vector<8x8xi32>
    %58 = arith.subi %27, %57 : vector<8x8xi32>
    %59 = arith.cmpi eq, %31, %58 : vector<8x8xi32>
    %60 = arith.ori %56, %59 : vector<8x8xi1>
    %c0_23 = arith.constant 0 : index
    %c0_24 = arith.constant 0 : index
    %61 = vector.load %arg7[%c0_23, %c0_24] : memref<8x1xf32, #tpu.memory_space<vmem>>, vector<8x1xf32>
    %cst_25 = arith.constant 0.000000e+00 : f32
    %62 = vector.broadcast %cst_25 : f32 to vector<8x8xf32>
    %63 = arith.select %60, %23, %62 : vector<8x8xi1>, vector<8x8xf32>
    %cst_26 = arith.constant dense<0.000000e+00> : vector<8xf32>
    %64 = vector.multi_reduction <add>, %63, %cst_26 [1] : vector<8x8xf32> to vector<8xf32>
    %65 = vector.shape_cast %64 : vector<8xf32> to vector<8x1xf32>
    %66 = arith.addf %61, %65 : vector<8x1xf32>
    %c0_27 = arith.constant 0 : index
    %c0_28 = arith.constant 0 : index
    %67 = vector.load %arg7[%c0_27, %c0_28] : memref<8x1xf32, #tpu.memory_space<vmem>>, vector<8x1xf32>
    tpu.vector_store %arg7[%c0_27, %c0_28], %66 {strides = array<i32>} : memref<8x1xf32, #tpu.memory_space<vmem>>, vector<8x1xf32>,
    %c0_i32_29 = arith.constant 0 : i32
    %68 = arith.cmpi eq, %arg1, %c0_i32_29 : i32
    %69 = arith.extui %68 : i1 to i32
    %c0_i32_30 = arith.constant 0 : i32
    %70 = arith.cmpi ne, %69, %c0_i32_30 : i32
    scf.if %70 {
      %c0_31 = arith.constant 0 : index
      %c0_32 = arith.constant 0 : index
      %71 = vector.load %arg5[%c0_31, %c0_32] : memref<8x1xf32, #tpu.memory_space<vmem>>, vector<8x1xf32>
      %c0_33 = arith.constant 0 : index
      %c0_34 = arith.constant 0 : index
      %72 = vector.load %arg6[%c0_33, %c0_34] : memref<8x1xf32, #tpu.memory_space<vmem>>, vector<8x1xf32>
      %73 = math.log %72 : vector<8x1xf32>
      %74 = arith.addf %71, %73 : vector<8x1xf32>
      %c0_35 = arith.constant 0 : index
      %c0_36 = arith.constant 0 : index
      %75 = vector.load %arg7[%c0_35, %c0_36] : memref<8x1xf32, #tpu.memory_space<vmem>>, vector<8x1xf32>
      %76 = arith.subf %74, %75 : vector<8x1xf32>
      %c8_i32_37 = arith.constant 8 : i32
      %77 = arith.muli %arg0, %c8_i32_37 : i32
      %78 = tpu.iota {dimensions = array<i32: 0>} : vector<8x1xi32>
      %79 = vector.broadcast %77 : i32 to vector<8x1xi32>
      %80 = arith.addi %79, %78 : vector<8x1xi32>
      %c8_i32_38 = arith.constant 8 : i32
      %81 = vector.broadcast %c8_i32_38 : i32 to vector<8x1xi32>
      %82 = arith.cmpi slt, %80, %81 : vector<8x1xi32>
      %cst_39 = arith.constant 0.000000e+00 : f32
      %83 = vector.broadcast %cst_39 : f32 to vector<8x1xf32>
      %84 = arith.select %82, %76, %83 : vector<8x1xi1>, vector<8x1xf32>
      %c0_40 = arith.constant 0 : index
      %c0_41 = arith.constant 0 : index
      %85 = vector.load %arg4[%c0_40, %c0_41] : memref<8x1xf32, #tpu.memory_space<vmem>>, vector<8x1xf32>
      tpu.vector_store %arg4[%c0_40, %c0_41], %84 {strides = array<i32>} : memref<8x1xf32, #tpu.memory_space<vmem>>, vector<8x1xf32>,
    } else {
    }
    return
  }
  func.func @transform_0(%arg0: i32, %arg1: i32) -> (i32, i32) {
    %c0_i32 = arith.constant 0 : i32
    %c0_i32_0 = arith.constant 0 : i32
    return %arg0, %c0_i32 : i32, i32
  }
  func.func @transform_1(%arg0: i32, %arg1: i32) -> (i32, i32) {
    %c0_i32 = arith.constant 0 : i32
    %c0_i32_0 = arith.constant 0 : i32
    return %arg1, %c0_i32 : i32, i32
  }
  func.func @transform_2(%arg0: i32, %arg1: i32) -> (i32, i32) {
    %c0_i32 = arith.constant 0 : i32
    %c0_i32_0 = arith.constant 0 : i32
    return %arg0, %c0_i32 : i32, i32
  }
}

</mosaic_0001>

<llo_original>
// kernel: tpu_custom_call.1
$region0: #{tpu_custom_call.1}
  #allocation0 [shape = 'u32[]', space=smem, size = 0x4, offset = 0x4, fixed_abs, tag = 'smem constant byte address 0x4 - core index']
  #allocation1 [shape = 'u32[144,128]{1,0:T(1,128)}', space=vmem, size = 0x12000, scoped, tag = 'internal scratch']
  #allocation2 [shape = 'f32[8,1]{1,0:T(8,128)}', space=vmem, size = 0x1000, scoped, tag = 'scratch operand']
  #allocation3 [shape = 'f32[8,1]{1,0:T(8,128)}', space=vmem, size = 0x1000, scoped, tag = 'scratch operand']
  #allocation4 [shape = 'f32[8,1]{1,0:T(8,128)}', space=vmem, size = 0x1000, scoped, tag = 'scratch operand']
  %s0 = inlined_call_operand.hbm [shape: f32[8,128], index: 0, kind: input, shape index: {}]
  %s1 = inlined_call_operand.hbm [shape: f32[8,128], index: 1, kind: input, shape index: {}]
  %s2 = inlined_call_operand.vmem [shape: f32[8,1], index: 2, kind: output, shape index: {}]
  %s3 = sld [smem:[#allocation0]]
  $region34: #{tpu_custom_call.1} parent=0
    _
  %s5 = ssub.s32 1, %s3
  %s6 = scalar_select 0, %s5, %s3
  $region1: #{tpu_custom_call.1} parent=0
    #allocation5 [shape = 'u8[4096]{0}', space=vmem, size = 0x1000, scoped, tag = 'input window, operand 0, single buffered']
    #allocation6 [shape = 's32[1]{0}', space=sflag, size = 0x4, scoped, tag = 'scoped memory for tpu_custom_call.1']
    #allocation7 [shape = 'u8[4096]{0}', space=vmem, size = 0x1000, scoped, tag = 'input window, operand 1, single buffered']
    #allocation8 [shape = 's32[1]{0}', space=sflag, size = 0x4, scoped, tag = 'scoped memory for tpu_custom_call.1']
    %7 = vsyncpa [#allocation6], 0
    %8 = vsyncpa [#allocation8], 0
    // Predicated region
    $region2: #{tpu_custom_call.1} parent=1 // pred_check
      _
    $region3: #{tpu_custom_call.1} parent=1 // pred_check_branch
      %10 = sbr.rel (0) target = $region5
    $region4: #{tpu_custom_call.1} parent=1 // pred_region
      %s12 = ssub.s32 128, 128
      %13 = vsyncadd [#allocation6], %s12
      %s15 = sshll.u32 [#allocation5], 4
      %s16 = int_to_ptr.vmem [resolvable:$true] %s15
      %18 = dma.hbm_to_vmem [thread:$0]  %s0, 128, %s16, [#allocation6]
    $region5: #{tpu_custom_call.1} parent=1 // pred_fallthru
      _
    // Predicated region
    $region6: #{tpu_custom_call.1} parent=1 // pred_check
      _
    $region7: #{tpu_custom_call.1} parent=1 // pred_check_branch
      %20 = sbr.rel (0) target = $region9
    $region8: #{tpu_custom_call.1} parent=1 // pred_region
      %s22 = ssub.s32 128, 128
      %23 = vsyncadd [#allocation8], %s22
      %s25 = sshll.u32 [#allocation7], 4
      %s26 = int_to_ptr.vmem [resolvable:$true] %s25
      %28 = dma.hbm_to_vmem [thread:$0]  %s1, 128, %s26, [#allocation8]
    $region9: #{tpu_custom_call.1} parent=1 // pred_fallthru
      _
    // Predicated region
    $region10: #{tpu_custom_call.1} parent=1 // pred_check
      _
    $region11: #{tpu_custom_call.1} parent=1 // pred_check_branch
      %30 = sbr.rel (0) target = $region13
    $region12: #{tpu_custom_call.1} parent=1 // pred_region
      %31 = dma.done [#allocation6], 128
    $region13: #{tpu_custom_call.1} parent=1 // pred_fallthru
      _
    // Predicated region
    $region14: #{tpu_custom_call.1} parent=1 // pred_check
      _
    $region15: #{tpu_custom_call.1} parent=1 // pred_check_branch
      %33 = sbr.rel (0) target = $region17
    $region16: #{tpu_custom_call.1} parent=1 // pred_region
      %34 = dma.done [#allocation8], 128
    $region17: #{tpu_custom_call.1} parent=1 // pred_fallthru
      _
    %p35 = scmp.eq.s32.totalorder 0, 0
    // Predicated region
    $region18: #{tpu_custom_call.1} parent=1 // pred_check
      %p36 = pneg %p35
    $region19: #{tpu_custom_call.1} parent=1 // pred_check_branch
      %38 = sbr.rel (%p36) target = $region21
    $region20: #{tpu_custom_call.1} parent=1 // pred_region
      %vm39 = vcmask 7168
      %40 = vst.msk [vmem:[#allocation2] sm:$0xff] %vm39, -inf
      %41 = vst.msk [vmem:[#allocation3] sm:$0xff] %vm39, 0.0
      %42 = vst.msk [vmem:[#allocation4] sm:$0xff] %vm39, 0.0
    $region21: #{tpu_custom_call.1} parent=1 // pred_fallthru
      _
    %v43 = vld [vmem:[#allocation5] sm:$0xff]
    %v44 = vld [vmem:[#allocation7] sm:$0xff]
    %v45 = vmul.f32 %v43, %v43
    %46 = vadd.xlane.f32.xlu0 %v45
    %v47 = vpop.xlane.xlu0 %46
    %v48 = vmax.f32 %v47, 1e-16
    %v49 = vrsqrt.pop %v48
    %v50 = vmul.f32 %v49, 2.0
    %v51 = vmul.f32 %v43, %v50
    %v52 = vmul.f32 %v44, %v44
    %53 = vadd.xlane.f32.xlu0 %v52
    %v54 = vpop.xlane.xlu0 %53
    %v55 = vmax.f32 %v54, 1e-16
    %v56 = vrsqrt.pop %v55
    %v57 = vmul.f32 %v44, %v56
    %58 = vmatprep.subr.mxu0 0.0
    %59 = vmatpush1.xpose.msra.mxu0 %v57
    %60 = vmatprep.subr.mxu0 0.0
    %61 = vmatpush1.xpose.msra.mxu0 0.0
    %62 = vmatprep.subr.mxu0 0.0
    %63 = vmatpush1.xpose.msra.mxu0 0.0
    %64 = vmatprep.subr.mxu0 0.0
    %65 = vmatpush1.xpose.msra.mxu0 0.0
    %66 = vmatprep.subr.mxu0 0.0
    %67 = vmatpush1.xpose.msra.mxu0 0.0
    %68 = vmatprep.subr.mxu0 0.0
    %69 = vmatpush1.xpose.msra.mxu0 0.0
    %70 = vmatprep.subr.mxu0 0.0
    %71 = vmatpush1.xpose.msra.mxu0 0.0
    %72 = vmatprep.subr.mxu0 0.0
    %73 = vmatpush1.xpose.msra.mxu0 0.0
    %74 = vmatprep.subr.mxu0 0.0
    %75 = vmatpush1.xpose.msra.mxu0 0.0
    %76 = vmatprep.subr.mxu0 0.0
    %77 = vmatpush1.xpose.msra.mxu0 0.0
    %78 = vmatprep.subr.mxu0 0.0
    %79 = vmatpush1.xpose.msra.mxu0 0.0
    %80 = vmatprep.subr.mxu0 0.0
    %81 = vmatpush1.xpose.msra.mxu0 0.0
    %82 = vmatprep.subr.mxu0 0.0
    %83 = vmatpush1.xpose.msra.mxu0 0.0
    %84 = vmatprep.subr.mxu0 0.0
    %85 = vmatpush1.xpose.msra.mxu0 0.0
    %86 = vmatprep.subr.mxu0 0.0
    %87 = vmatpush1.xpose.msra.mxu0 0.0
    %88 = vmatprep.subr.mxu0 0.0
    %89 = vmatpush1.xpose.msra.mxu0 0.0
    %90 = vmatprep.subr.mxu0 0.0
    %91 = vmatpush1.xpose.msra.mxu0 0.0
    %92 = vmatprep.subr.mxu0 0.0
    %93 = vmatpush1.xpose.msra.mxu0 0.0
    %94 = vmatprep.subr.mxu0 0.0
    %95 = vmatpush1.xpose.msra.mxu0 0.0
    %96 = vmatprep.subr.mxu0 0.0
    %97 = vmatpush1.xpose.msra.mxu0 0.0
    %98 = vmatprep.subr.mxu0 0.0
    %99 = vmatpush1.xpose.msra.mxu0 0.0
    %100 = vmatprep.subr.mxu0 0.0
    %101 = vmatpush1.xpose.msra.mxu0 0.0
    %102 = vmatprep.subr.mxu0 0.0
    %103 = vmatpush1.xpose.msra.mxu0 0.0
    %104 = vmatprep.subr.mxu0 0.0
    %105 = vmatpush1.xpose.msra.mxu0 0.0
    %106 = vmatprep.subr.mxu0 0.0
    %107 = vmatpush1.xpose.msra.mxu0 0.0
    %108 = vmatprep.subr.mxu0 0.0
    %109 = vmatpush1.xpose.msra.mxu0 0.0
    %110 = vmatprep.subr.mxu0 0.0
    %111 = vmatpush1.xpose.msra.mxu0 0.0
    %112 = vmatprep.subr.mxu0 0.0
    %113 = vmatpush1.xpose.msra.mxu0 0.0
    %114 = vmatprep.subr.mxu0 0.0
    %115 = vmatpush1.xpose.msra.mxu0 0.0
    %116 = vmatprep.subr.mxu0 0.0
    %117 = vmatpush1.xpose.msra.mxu0 0.0
    %118 = vmatprep.subr.mxu0 0.0
    %119 = vmatpush1.xpose.msra.mxu0 0.0
    %120 = vmatprep.subr.mxu0 0.0
    %121 = vmatpush1.xpose.msra.mxu0 0.0
    %122 = vmatprep.mubr.f32.mxu0 0.0
    %123 = vmatmul.mubr.f32.gmra.mrb[0].mxu0 %v51
    %v124 = vpop.f32.mrb[0].mxu0
    %v125 = vadd.f32 0.0, %v124
    %v126 = vpop.f32.mrb[0].mxu0
    %127 = vdwg.mxu0
    %s128 = smul.u32 0, 8
    %v129 = vlaneseq
    %v130 = vshrl.u32 %v129, 7
    %v131 = vstv %s128
    %v132 = vadd.s32 %v131, %v130
    %s133 = smul.u32 0, 8
    %v134 = vlaneseq
    %v135 = vand.u32 %v134, 127
    %v136 = vstv %s133
    %v137 = vadd.s32 %v136, %v135
    %vm138 = vcmp.eq.s32.totalorder %v132, %v137
    %vm139 = vcmp.ge.s32.totalorder %v137, 8
    %vm140 = vmor %vm138, %vm139
    %v141 = vsel %vm140, -1e+30, %v125
    %v142 = vld [vmem:[#allocation2] sm:$0xff]
    %vm143 = vcmask 64512
    %v144 = vsel %vm143, %v141, -inf
    %145 = vmax.xlane.f32.xlu0 %v144
    %v146 = vpop.xlane.xlu0 %145
    %v147 = vmax.f32 %v142, %v146
    %v148 = vsub.f32 %v142, %v147
    %v149 = vmul.f32 %v148, 1.442695
    %v150 = vpow.pop %v149
    %v151 = vld [vmem:[#allocation3] sm:$0xff]
    %v152 = vmul.f32 %v150, %v151
    %154 = vset.pattern.permute.xlu0 0
    %155 = vperm.xlu0 %154, %v147
    %v156 = vpop.permute.xlu0 %155
    %v158 = vsub.f32 %v141, %v156
    %v159 = vmul.f32 %v158, 1.442695
    %v160 = vpow.pop %v159
    %v161 = vsel %vm143, %v160, 0.0
    %162 = vadd.xlane.f32.xlu0 %v161
    %v163 = vpop.xlane.xlu0 %162
    %v164 = vadd.f32 %v152, %v163
    %vm165 = vcmask 7168
    %166 = vst.msk [vmem:[#allocation3] sm:$0xff] %vm165, %v164
    %167 = vst.msk [vmem:[#allocation2] sm:$0xff] %vm165, %v147
    %v168 = vadd.s32 %v132, 4
    %vm169 = vcmp.eq.s32.totalorder %v137, %v168
    %v170 = vsub.s32 %v132, 4
    %vm171 = vcmp.eq.s32.totalorder %v137, %v170
    %vm172 = vmor %vm169, %vm171
    %v173 = vld [vmem:[#allocation4] sm:$0xff]
    %v174 = vsel %vm172, %v125, 0.0
    %v175 = vsel %vm143, %v174, 0.0
    %176 = vadd.xlane.f32.xlu0 %v175
    %v177 = vpop.xlane.xlu0 %176
    %v178 = vadd.f32 %v173, %v177
    %179 = vst.msk [vmem:[#allocation4] sm:$0xff] %vm165, %v178
    // Predicated region
    $region22: #{tpu_custom_call.1} parent=1 // pred_check
      %p180 = pneg %p35
    $region23: #{tpu_custom_call.1} parent=1 // pred_check_branch
      %182 = sbr.rel (%p180) target = $region25
    $region24: #{tpu_custom_call.1} parent=1 // pred_region
      %v183 = vld [vmem:[#allocation2] sm:$0xff]
      %v184 = vld [vmem:[#allocation3] sm:$0xff]
      %v185 = vlog2.pop %v184
      %v186 = vmul.f32 %v185, 0.6931472
      %v187 = vadd.f32 %v183, %v186
      %v188 = vld [vmem:[#allocation4] sm:$0xff]
      %v189 = vsub.f32 %v187, %v188
      %vm190 = vcmp.lt.s32.totalorder %v132, 8
      %v191 = vsel %vm190, %v189, 0.0
      %192 = vst.msk [vmem:[%s2] sm:$0xff] %vm165, %v191
    $region25: #{tpu_custom_call.1} parent=1 // pred_fallthru
      _
    // Predicated region
    $region26: #{tpu_custom_call.1} parent=1 // pred_check
      _
    $region27: #{tpu_custom_call.1} parent=1 // pred_check_branch
      %194 = sbr.rel (0) target = $region29
    $region28: #{tpu_custom_call.1} parent=1 // pred_region
      _
    $region29: #{tpu_custom_call.1} parent=1 // pred_fallthru
      _
    // Predicated region
    $region30: #{tpu_custom_call.1} parent=1 // pred_check
      _
    $region31: #{tpu_custom_call.1} parent=1 // pred_check_branch
      %196 = sbr.rel (0) target = $region33
    $region32: #{tpu_custom_call.1} parent=1 // pred_region
      _
    $region33: #{tpu_custom_call.1} parent=1 // pred_fallthru
      _
    %197 = vsyncpa [#allocation6], 1
    %198 = vsyncpa [#allocation8], 1

</llo_original>
